<compile_context>
chip_gen: v6e
topology: v6e:2x2x1
jax: 0.10.0
libtpu: 0.0.40
codegen_flags: <defaults>
</compile_context>

<pallas_src>
import jax
import jax.numpy as jnp
from jax.experimental import pallas as pl
from jax.experimental.pallas import tpu as pltpu


def pdhg_layer_forward(x, y, A, AT, c, b, params, *, num_iters=1):
    """Apply the PDHG layer `num_iters` times.

    x: (B, Nx, D) or (Nx, D);  y: (B, Ny, D) or (Ny, D)
    A: (Ny, Nx);  AT: (Nx, Ny);  c: (B, Nx, 1) or (Nx, 1);  b: (B, Ny, 1) or (Ny, 1)
    params: PyTorch-convention weights (out,in), biases (out,), tau/sigma (1,).
    num_iters=1 is exactly the PyTorch module forward.
    Returns (x_out, y_out) with the same batching as the inputs.
    """
    f32 = jnp.float32
    x = jnp.asarray(x, f32)
    y = jnp.asarray(y, f32)
    c = jnp.asarray(c, f32)
    b = jnp.asarray(b, f32)
    A = jnp.asarray(A, f32)
    AT = jnp.asarray(AT, f32)

    unbatched = x.ndim == 2
    if unbatched:
        x, y, c, b = x[None], y[None], c[None], b[None]

    Bsz, Nx, D = x.shape
    Ny = y.shape[1]
    K = int(num_iters)
    assert K >= 1

    def rup(n, m):
        return ((n + m - 1) // m) * m

    Nx_p, Ny_p = rup(Nx, 8), rup(Ny, 8)
    Dp = rup(D, 128)
    Nz = Nx_p + Ny_p

    tau = jnp.asarray(params["tau"], f32).reshape(())
    sigma = jnp.asarray(params["sigma"], f32).reshape(())

    def wpad(w):  # nn.Linear weight (out,in) -> transposed (in,out), zero-padded to (Dp,Dp)
        w = jnp.asarray(w, f32).T
        return jnp.pad(w, ((0, Dp - w.shape[0]), (0, Dp - w.shape[1])))

    def brow(v):  # bias (out,) -> (1, out)
        return jnp.asarray(v, f32).reshape(1, -1)

    # ---- weight slab (Dp, 4*Dp): [Ukx | tau*Uky | Vky | sigma*(Vkx - 2*Wkx)] ----
    w_slab = jnp.concatenate(
        [wpad(params["Ukx_w"]),
         tau * wpad(params["Uky_w"]),
         wpad(params["Vky_w"]),
         sigma * (wpad(params["Vkx_w"]) - 2.0 * wpad(params["Wkx_w"]))],
        axis=1)

    # ---- constant slab: all biases + tau*c + sigma*b folded into per-row constants ----
    # AT @ (1 x Uky_b) == rowsum(AT) (x) Uky_b   (exact algebra), same for A / bcomb.
    rs_AT = jnp.sum(AT, axis=1, keepdims=True)                   # (Nx, 1)
    rs_A = jnp.sum(A, axis=1, keepdims=True)                     # (Ny, 1)
    bcomb = sigma * (brow(params["Vkx_b"]) - 2.0 * brow(params["Wkx_b"]))
    const_x = brow(params["Ukx_b"]) - tau * c + rs_AT * (tau * brow(params["Uky_b"]))  # (B,Nx,D)
    const_y = brow(params["Vky_b"]) - sigma * b - rs_A * bcomb                         # (B,Ny,D)
    const_x = jnp.pad(const_x, ((0, 0), (0, Nx_p - Nx), (0, Dp - D)))
    const_y = jnp.pad(const_y, ((0, 0), (0, Ny_p - Ny), (0, Dp - D)))
    c_slab = jnp.concatenate([const_x, const_y], axis=1)          # (B, Nz, Dp)

    # ---- state slab z0 = [x ; y], zero-padded ----
    z0 = jnp.concatenate(
        [jnp.pad(x, ((0, 0), (0, Nx_p - Nx), (0, Dp - D))),
         jnp.pad(y, ((0, 0), (0, Ny_p - Ny), (0, Dp - D)))], axis=1)  # (B, Nz, Dp)

    A_p = jnp.pad(A, ((0, Ny_p - Ny), (0, Nx_p - Nx)))
    AT_p = jnp.pad(AT, ((0, Nx_p - Nx), (0, Ny_p - Ny)))

    def kernel(z0_ref, cst_ref, a_ref, at_ref, w_ref, zo_ref, z_scr):
        k = pl.program_id(1)

        @pl.when(k == 0)
        def _():
            z_scr[...] = z0_ref[...]          # load initial (x, y) state for this instance

        x_cur = z_scr[:Nx_p, :]
        y_cur = z_scr[Nx_p:, :]

        # y path: one matmul on the lane-aligned [tau*Uky | Vky] block, split at lane Dp.
        y_both = jnp.dot(y_cur, w_ref[:, Dp:3 * Dp], preferred_element_type=jnp.float32)
        uy = y_both[:, :Dp]                   # tau * Uky(y)   (bias folded into constants)
        vy = y_both[:, Dp:]                   # Vky(y)         (bias folded into constants)

        # x update: relu(Ukx(x) + AT @ (tau*Uky(y)) + [Ukx_b - tau*c + rs(AT)*tau*Uky_b])
        x_lin = jnp.dot(x_cur, w_ref[:, :Dp], preferred_element_type=jnp.float32)
        at_uy = jnp.dot(at_ref[...], uy, preferred_element_type=jnp.float32)
        x_new = jnp.maximum(x_lin + at_uy + cst_ref[:Nx_p, :], 0.0)

        # y update: relu(Vky(y) - A @ (sigma*(Vkx - 2*Wkx)(x_new)) + folded constants)
        comb = jnp.dot(x_new, w_ref[:, 3 * Dp:], preferred_element_type=jnp.float32)
        a_comb = jnp.dot(a_ref[...], comb, preferred_element_type=jnp.float32)
        y_new = jnp.maximum(vy - a_comb + cst_ref[Nx_p:, :], 0.0)

        z_scr[:Nx_p, :] = x_new
        z_scr[Nx_p:, :] = y_new

        @pl.when(k == pl.num_programs(1) - 1)
        def _():
            zo_ref[...] = z_scr[...]          # single HBM writeback per instance

    grid_spec = pltpu.PrefetchScalarGridSpec(
        num_scalar_prefetch=0,
        grid=(Bsz, K),
        in_specs=[
            pl.BlockSpec((None, Nz, Dp), lambda bb, kk: (bb, 0, 0)),   # z0 (per instance)
            pl.BlockSpec((None, Nz, Dp), lambda bb, kk: (bb, 0, 0)),   # constants (per instance)
            pl.BlockSpec((Ny_p, Nx_p), lambda bb, kk: (0, 0)),         # A  (VMEM-resident)
            pl.BlockSpec((Nx_p, Ny_p), lambda bb, kk: (0, 0)),         # AT (VMEM-resident)
            pl.BlockSpec((Dp, 4 * Dp), lambda bb, kk: (0, 0)),         # weight slab (resident)
        ],
        out_specs=pl.BlockSpec((None, Nz, Dp), lambda bb, kk: (bb, 0, 0)),
        scratch_shapes=[pltpu.VMEM((Nz, Dp), jnp.float32)],
    )

    step_flops = 2 * (Ny_p * Dp * 2 * Dp + Nx_p * Dp * Dp + Nx_p * Ny_p * Dp
                      + Nx_p * Dp * Dp + Ny_p * Nx_p * Dp)
    cost = pl.CostEstimate(
        flops=int(Bsz * K * step_flops),
        transcendentals=0,
        bytes_accessed=int(4 * (3 * Bsz * Nz * Dp + Ny_p * Nx_p + Nx_p * Ny_p + Dp * 4 * Dp)))

    z_out = pl.pallas_call(
        kernel,
        out_shape=jax.ShapeDtypeStruct((Bsz, Nz, Dp), f32),
        grid_spec=grid_spec,
        cost_estimate=cost,
        compiler_params=pltpu.CompilerParams(
            dimension_semantics=("parallel", "arbitrary"),
            vmem_limit_bytes=32 * 1024 * 1024,   # KB-scale footprint; safe on v5e/v6e/v7x
        ),
    )(z0, c_slab, A_p, AT_p, w_slab)

    x_out = z_out[:, :Nx, :D]
    y_out = z_out[:, Nx_p:Nx_p + Ny, :D]
    if unbatched:
        x_out, y_out = x_out[0], y_out[0]
    return x_out, y_out


if __name__ == "__main__":
    # Module shape constraints force x_size == y_size == out_size == D.
    D, Nx, Ny, Bsz = 32, 16, 24, 2

    key = jax.random.PRNGKey(0)
    ks = jax.random.split(key, 20)

    x = jax.random.normal(ks[0], (Bsz, Nx, D), jnp.float32)
    y = jax.random.normal(ks[1], (Bsz, Ny, D), jnp.float32)
    A = jax.random.normal(ks[2], (Ny, Nx), jnp.float32)
    AT = A.T
    c = jax.random.normal(ks[3], (Bsz, Nx, 1), jnp.float32)
    b = jax.random.normal(ks[4], (Bsz, Ny, 1), jnp.float32)

    def uinit(k, shape):
        bound = 1.0 / jnp.sqrt(shape[-1])
        return jax.random.uniform(k, shape, jnp.float32, -bound, bound)

    params = {
        # nn.Linear convention: weight (out_features, in_features), bias (out_features,)
        "Ukx_w": uinit(ks[5], (D, D)),  "Ukx_b": uinit(ks[6], (D,)),
        "Uky_w": uinit(ks[7], (D, D)),  "Uky_b": uinit(ks[8], (D,)),
        "tau":   0.25 * jax.random.normal(ks[9], (1,), jnp.float32),
        "Vky_w": uinit(ks[10], (D, D)), "Vky_b": uinit(ks[11], (D,)),
        "Wkx_w": uinit(ks[12], (D, D)), "Wkx_b": uinit(ks[13], (D,)),
        "Vkx_w": uinit(ks[14], (D, D)), "Vkx_b": uinit(ks[15], (D,)),
        "sigma": 0.25 * jax.random.normal(ks[16], (1,), jnp.float32),
    }

    def layer_ref(xv, yv, cv, bv):
        """Plain-JAX mirror of the PyTorch pdhg_layer forward (single instance, one step)."""
        f32 = jnp.float32

        def lin(v, w, bb):
            return v @ jnp.asarray(w, f32).T + jnp.asarray(bb, f32)

        one = jnp.ones((1, D), f32)
        tau = jnp.asarray(params["tau"], f32)
        sigma = jnp.asarray(params["sigma"], f32)
        xn = jax.nn.relu(lin(xv, params["Ukx_w"], params["Ukx_b"])
                         - tau * (cv @ one - AT @ lin(yv, params["Uky_w"], params["Uky_b"])))
        yn = jax.nn.relu(lin(yv, params["Vky_w"], params["Vky_b"])
                         - sigma * (bv @ one
                                    - 2.0 * (A @ lin(xn, params["Wkx_w"], params["Wkx_b"]))
                                    + A @ lin(xn, params["Vkx_w"], params["Vkx_b"])))
        return xn, yn

    def ref_iterate(K):
        xs, ys = [], []
        for i in range(Bsz):
            xv, yv = x[i], y[i]
            for _ in range(K):
                xv, yv = layer_ref(xv, yv, c[i], b[i])
            xs.append(xv)
            ys.append(yv)
        return jnp.stack(xs), jnp.stack(ys)

    def max_rel_err(a, r):
        return float(jnp.max(jnp.abs(a - r))) / (1.0 + float(jnp.max(jnp.abs(r))))

    # K = 1: exactly the PyTorch module forward (per batch instance).
    x1, y1 = pdhg_layer_forward(x, y, A, AT, c, b, params, num_iters=1)
    jax.block_until_ready((x1, y1))
    xr1, yr1 = ref_iterate(1)
    assert max_rel_err(x1, xr1) < 1e-4, "x mismatch (K=1)"
    assert max_rel_err(y1, yr1) < 1e-4, "y mismatch (K=1)"

    # K = 3: the unrolled PDHG recurrence, state carried in VMEM across grid steps.
    x3, y3 = pdhg_layer_forward(x, y, A, AT, c, b, params, num_iters=3)
    jax.block_until_ready((x3, y3))
    xr3, yr3 = ref_iterate(3)
    assert max_rel_err(x3, xr3) < 1e-3, "x mismatch (K=3)"
    assert max_rel_err(y3, yr3) < 1e-3, "y mismatch (K=3)"

    print("KERNEL_OK")
</pallas_src>

<mosaic_0001>
module attributes {stable_mosaic.version = 11 : i64} {
  func.func @kernel(%arg0: i32, %arg1: i32, %arg2: memref<1x40x128xf32, #tpu.memory_space<vmem>>, %arg3: memref<1x40x128xf32, #tpu.memory_space<vmem>>, %arg4: memref<24x16xf32, #tpu.memory_space<vmem>>, %arg5: memref<16x24xf32, #tpu.memory_space<vmem>>, %arg6: memref<128x512xf32, #tpu.memory_space<vmem>>, %arg7: memref<1x40x128xf32, #tpu.memory_space<vmem>>, %arg8: memref<40x128xf32, #tpu.memory_space<vmem>>) attributes {dimension_semantics = [#tpu.dimension_semantics<parallel>, #tpu.dimension_semantics<arbitrary>], iteration_bounds = array<i64: 2, 1>, scalar_prefetch = 0 : i64, scratch_operands = 1 : i64, tpu.core_type = #tpu.core_type<tc>, window_params = [{transform_indices = @transform_0, window_bounds = array<i64: 1, 40, 128>}, {transform_indices = @transform_1, window_bounds = array<i64: 1, 40, 128>}, {pipeline_mode = #tpu.pipeline_mode<synchronous>, transform_indices = @transform_2, window_bounds = array<i64: 24, 16>}, {pipeline_mode = #tpu.pipeline_mode<synchronous>, transform_indices = @transform_3, window_bounds = array<i64: 16, 24>}, {pipeline_mode = #tpu.pipeline_mode<synchronous>, transform_indices = @transform_4, window_bounds = array<i64: 128, 512>}, {transform_indices = @transform_5, window_bounds = array<i64: 1, 40, 128>}]} {
    %c0_i32 = arith.constant 0 : i32
    %0 = arith.cmpi eq, %arg1, %c0_i32 : i32
    %1 = arith.extui %0 : i1 to i32
    %c0_i32_0 = arith.constant 0 : i32
    %2 = arith.cmpi ne, %1, %c0_i32_0 : i32
    scf.if %2 {
      %c0_29 = arith.constant 0 : index
      %c0_30 = arith.constant 0 : index
      %c0_31 = arith.constant 0 : index
      %34 = vector.load %arg2[%c0_29, %c0_30, %c0_31] : memref<1x40x128xf32, #tpu.memory_space<vmem>>, vector<1x40x128xf32>
      %35 = vector.shape_cast %34 : vector<1x40x128xf32> to vector<40x128xf32>
      %c0_32 = arith.constant 0 : index
      %c0_33 = arith.constant 0 : index
      %36 = vector.load %arg8[%c0_32, %c0_33] : memref<40x128xf32, #tpu.memory_space<vmem>>, vector<40x128xf32>
      tpu.vector_store %arg8[%c0_32, %c0_33], %35 {strides = array<i32>} : memref<40x128xf32, #tpu.memory_space<vmem>>, vector<40x128xf32>,
    } else {
    }
    %c0 = arith.constant 0 : index
    %c0_1 = arith.constant 0 : index
    %3 = vector.load %arg8[%c0, %c0_1] : memref<40x128xf32, #tpu.memory_space<vmem>>, vector<16x128xf32>
    %c16 = arith.constant 16 : index
    %c0_2 = arith.constant 0 : index
    %4 = vector.load %arg8[%c16, %c0_2] : memref<40x128xf32, #tpu.memory_space<vmem>>, vector<24x128xf32>
    %c0_3 = arith.constant 0 : index
    %c128 = arith.constant 128 : index
    %5 = vector.load %arg6[%c0_3, %c128] : memref<128x512xf32, #tpu.memory_space<vmem>>, vector<128x256xf32>
    %cst = arith.constant dense<0.000000e+00> : vector<24x256xf32>
    %6 = tpu.matmul %4, %5, %cst {dimension_numbers = #tpu.dot_dimension_numbers<[1], [0], [0], [1], [0, 0, 1, 1], [], []>} : vector<24x128xf32>, vector<128x256xf32>, vector<24x256xf32> -> vector<24x256xf32>
    %7 = vector.extract_strided_slice %6 {offsets = [0, 0], sizes = [24, 128], strides = [1, 1]} : vector<24x256xf32> to vector<24x128xf32>
    %8 = vector.extract_strided_slice %6 {offsets = [0, 128], sizes = [24, 128], strides = [1, 1]} : vector<24x256xf32> to vector<24x128xf32>
    %c0_4 = arith.constant 0 : index
    %c0_5 = arith.constant 0 : index
    %9 = vector.load %arg6[%c0_4, %c0_5] : memref<128x512xf32, #tpu.memory_space<vmem>>, vector<128x128xf32>
    %cst_6 = arith.constant dense<0.000000e+00> : vector<16x128xf32>
    %10 = tpu.matmul %3, %9, %cst_6 {dimension_numbers = #tpu.dot_dimension_numbers<[1], [0], [0], [1], [0, 0, 1, 1], [], []>} : vector<16x128xf32>, vector<128x128xf32>, vector<16x128xf32> -> vector<16x128xf32>
    %c0_7 = arith.constant 0 : index
    %c0_8 = arith.constant 0 : index
    %11 = vector.load %arg5[%c0_7, %c0_8] : memref<16x24xf32, #tpu.memory_space<vmem>>, vector<16x24xf32>
    %cst_9 = arith.constant dense<0.000000e+00> : vector<16x128xf32>
    %12 = tpu.matmul %11, %7, %cst_9 {dimension_numbers = #tpu.dot_dimension_numbers<[1], [0], [0], [1], [0, 0, 1, 1], [], []>} : vector<16x24xf32>, vector<24x128xf32>, vector<16x128xf32> -> vector<16x128xf32>
    %13 = arith.addf %10, %12 : vector<16x128xf32>
    %c0_10 = arith.constant 0 : index
    %c0_11 = arith.constant 0 : index
    %c0_12 = arith.constant 0 : index
    %14 = vector.load %arg3[%c0_10, %c0_11, %c0_12] : memref<1x40x128xf32, #tpu.memory_space<vmem>>, vector<1x16x128xf32>
    %15 = vector.shape_cast %14 : vector<1x16x128xf32> to vector<16x128xf32>
    %16 = arith.addf %13, %15 : vector<16x128xf32>
    %cst_13 = arith.constant 0.000000e+00 : f32
    %17 = vector.broadcast %cst_13 : f32 to vector<16x128xf32>
    %18 = arith.maximumf %16, %17 : vector<16x128xf32>
    %c0_14 = arith.constant 0 : index
    %c384 = arith.constant 384 : index
    %19 = vector.load %arg6[%c0_14, %c384] : memref<128x512xf32, #tpu.memory_space<vmem>>, vector<128x128xf32>
    %cst_15 = arith.constant dense<0.000000e+00> : vector<16x128xf32>
    %20 = tpu.matmul %18, %19, %cst_15 {dimension_numbers = #tpu.dot_dimension_numbers<[1], [0], [0], [1], [0, 0, 1, 1], [], []>} : vector<16x128xf32>, vector<128x128xf32>, vector<16x128xf32> -> vector<16x128xf32>
    %c0_16 = arith.constant 0 : index
    %c0_17 = arith.constant 0 : index
    %21 = vector.load %arg4[%c0_16, %c0_17] : memref<24x16xf32, #tpu.memory_space<vmem>>, vector<24x16xf32>
    %cst_18 = arith.constant dense<0.000000e+00> : vector<24x128xf32>
    %22 = tpu.matmul %21, %20, %cst_18 {dimension_numbers = #tpu.dot_dimension_numbers<[1], [0], [0], [1], [0, 0, 1, 1], [], []>} : vector<24x16xf32>, vector<16x128xf32>, vector<24x128xf32> -> vector<24x128xf32>
    %23 = arith.subf %8, %22 : vector<24x128xf32>
    %c0_19 = arith.constant 0 : index
    %c16_20 = arith.constant 16 : index
    %c0_21 = arith.constant 0 : index
    %24 = vector.load %arg3[%c0_19, %c16_20, %c0_21] : memref<1x40x128xf32, #tpu.memory_space<vmem>>, vector<1x24x128xf32>
    %25 = vector.shape_cast %24 : vector<1x24x128xf32> to vector<24x128xf32>
    %26 = arith.addf %23, %25 : vector<24x128xf32>
    %cst_22 = arith.constant 0.000000e+00 : f32
    %27 = vector.broadcast %cst_22 : f32 to vector<24x128xf32>
    %28 = arith.maximumf %26, %27 : vector<24x128xf32>
    %c0_23 = arith.constant 0 : index
    %c0_24 = arith.constant 0 : index
    %29 = vector.load %arg8[%c0_23, %c0_24] : memref<40x128xf32, #tpu.memory_space<vmem>>, vector<16x128xf32>
    tpu.vector_store %arg8[%c0_23, %c0_24], %18 {strides = array<i32>} : memref<40x128xf32, #tpu.memory_space<vmem>>, vector<16x128xf32>,
    %c16_25 = arith.constant 16 : index
    %c0_26 = arith.constant 0 : index
    %30 = vector.load %arg8[%c16_25, %c0_26] : memref<40x128xf32, #tpu.memory_space<vmem>>, vector<24x128xf32>
    tpu.vector_store %arg8[%c16_25, %c0_26], %28 {strides = array<i32>} : memref<40x128xf32, #tpu.memory_space<vmem>>, vector<24x128xf32>,
    %c0_i32_27 = arith.constant 0 : i32
    %31 = arith.cmpi eq, %arg1, %c0_i32_27 : i32
    %32 = arith.extui %31 : i1 to i32
    %c0_i32_28 = arith.constant 0 : i32
    %33 = arith.cmpi ne, %32, %c0_i32_28 : i32
    scf.if %33 {
      %c0_29 = arith.constant 0 : index
      %c0_30 = arith.constant 0 : index
      %34 = vector.load %arg8[%c0_29, %c0_30] : memref<40x128xf32, #tpu.memory_space<vmem>>, vector<40x128xf32>
      %c0_31 = arith.constant 0 : index
      %c0_32 = arith.constant 0 : index
      %c0_33 = arith.constant 0 : index
      %35 = vector.load %arg7[%c0_31, %c0_32, %c0_33] : memref<1x40x128xf32, #tpu.memory_space<vmem>>, vector<1x40x128xf32>
      %36 = vector.shape_cast %35 : vector<1x40x128xf32> to vector<40x128xf32>
      %37 = vector.shape_cast %34 : vector<40x128xf32> to vector<1x40x128xf32>
      tpu.vector_store %arg7[%c0_31, %c0_32, %c0_33], %37 {strides = array<i32>} : memref<1x40x128xf32, #tpu.memory_space<vmem>>, vector<1x40x128xf32>,
    } else {
    }
    return
  }
  func.func @transform_0(%arg0: i32, %arg1: i32) -> (i32, i32, i32) {
    %c0_i32 = arith.constant 0 : i32
    %c0_i32_0 = arith.constant 0 : i32
    %c0_i32_1 = arith.constant 0 : i32
    return %arg0, %c0_i32, %c0_i32_0 : i32, i32, i32
  }
  func.func @transform_1(%arg0: i32, %arg1: i32) -> (i32, i32, i32) {
    %c0_i32 = arith.constant 0 : i32
    %c0_i32_0 = arith.constant 0 : i32
    %c0_i32_1 = arith.constant 0 : i32
    return %arg0, %c0_i32, %c0_i32_0 : i32, i32, i32
  }
  func.func @transform_2(%arg0: i32, %arg1: i32) -> (i32, i32) {
    %c0_i32 = arith.constant 0 : i32
    %c0_i32_0 = arith.constant 0 : i32
    %c0_i32_1 = arith.constant 0 : i32
    return %c0_i32, %c0_i32_0 : i32, i32
  }
  func.func @transform_3(%arg0: i32, %arg1: i32) -> (i32, i32) {
    %c0_i32 = arith.constant 0 : i32
    %c0_i32_0 = arith.constant 0 : i32
    %c0_i32_1 = arith.constant 0 : i32
    return %c0_i32, %c0_i32_0 : i32, i32
  }
  func.func @transform_4(%arg0: i32, %arg1: i32) -> (i32, i32) {
    %c0_i32 = arith.constant 0 : i32
    %c0_i32_0 = arith.constant 0 : i32
    %c0_i32_1 = arith.constant 0 : i32
    return %c0_i32, %c0_i32_0 : i32, i32
  }
  func.func @transform_5(%arg0: i32, %arg1: i32) -> (i32, i32, i32) {
    %c0_i32 = arith.constant 0 : i32
    %c0_i32_0 = arith.constant 0 : i32
    %c0_i32_1 = arith.constant 0 : i32
    return %arg0, %c0_i32, %c0_i32_0 : i32, i32, i32
  }
}

</mosaic_0001>

<llo_original>
// kernel: tpu_custom_call.1
$region0: #{tpu_custom_call.1}
  #allocation0 [shape = 'u32[]', space=smem, size = 0x4, offset = 0x4, fixed_abs, tag = 'smem constant byte address 0x4 - core index']
  #allocation1 [shape = 'u32[144,128]{1,0:T(1,128)}', space=vmem, size = 0x12000, scoped, tag = 'internal scratch']
  #allocation2 [shape = 'f32[40,128]{1,0:T(8,128)}', space=vmem, size = 0x5000, scoped, tag = 'scratch operand']
  %s0 = inlined_call_operand.hbm [shape: f32[2,40,128], index: 0, kind: input, shape index: {}]
  %s1 = inlined_call_operand.hbm [shape: f32[2,40,128], index: 1, kind: input, shape index: {}]
  %s2 = inlined_call_operand.vmem [shape: f32[24,16], index: 2, kind: input, shape index: {}]
  %s3 = inlined_call_operand.vmem [shape: f32[16,24], index: 3, kind: input, shape index: {}]
  %s4 = inlined_call_operand.hbm [shape: f32[128,512], index: 4, kind: input, shape index: {}]
  %s5 = inlined_call_operand.hbm [shape: f32[2,40,128], index: 5, kind: output, shape index: {}]
  %s6 = sld [smem:[#allocation0]]
  $region73: #{tpu_custom_call.1} parent=0
    _
  %s8 = ssub.s32 1, %s6
  %s9 = scalar_select 0, %s8, %s6
  $region1: #{tpu_custom_call.1} parent=0
    #allocation3 [shape = 'u8[40960]{0}', space=vmem, size = 0xa000, scoped, tag = 'input window, operand 0']
    #allocation4 [shape = 's32[2]{0}', space=sflag, size = 0x8, scoped, tag = 'scoped memory for tpu_custom_call.1']
    #allocation5 [shape = 's32[2]{0}', space=sflag, size = 0x8, scoped, tag = 'scoped memory for tpu_custom_call.1']
    #allocation6 [shape = 'u8[40960]{0}', space=vmem, size = 0xa000, scoped, tag = 'input window, operand 1']
    #allocation7 [shape = 's32[2]{0}', space=sflag, size = 0x8, scoped, tag = 'scoped memory for tpu_custom_call.1']
    #allocation8 [shape = 'u8[262144]{0}', space=vmem, size = 0x40000, scoped, tag = 'input window, operand 4, single buffered']
    #allocation9 [shape = 'u8[40960]{0}', space=vmem, size = 0xa000, scoped, tag = 'output window, operand 0']
    %10 = vsyncpa [#allocation4], 0
    %s11 = scalar_lea.sflag [#allocation4], 1
    %12 = vsyncpa %s11, 0
    %13 = vsyncpa [#allocation7], 0
    %s14 = scalar_lea.sflag [#allocation7], 1
    %15 = vsyncpa %s14, 0
    %16 = vsyncpa [#allocation5], 0
    %s17 = scalar_lea.sflag [#allocation5], 1
    %18 = vsyncpa %s17, 0
    loop: start=0, step=1, limit=4
    $region2: #{tpu_custom_call.1} parent=1 // loop_pre_header
      _
    $region3: #{tpu_custom_call.1} parent=1 // loop_header
      %s20 = sphi 0, %s24
      %p21 = scmp.ge.s32.totalorder %s20, 4
      %s27 = sphi 0, %s39
      %s28 = sphi 0, %s35
      %s29 = sphi 0, %s27
      %s30 = sphi 0, %s28
      %s31 = sphi 0, %s29
      %s32 = sphi 0, %s30
      %s42 = sphi 0, %s44
      %s45 = sphi 0, %s42
      %s46 = sphi 0, %s45
      %s62 = sphi 0, %s46
      %s68 = sphi 0, %s70
      %s71 = sphi 0, %s68
      %s72 = sphi 0, %s71
      %s88 = sphi 0, %s72
      %s92 = sphi 0, %s92
      %s94 = sphi 0, %s92
      %s95 = sphi 0, %s94
      %s109 = sphi 0, %s95
      %s113 = sphi 0, %s113
      %s115 = sphi 0, %s113
      %s116 = sphi 0, %s115
      %s130 = sphi 0, %s116
      %s134 = sphi 0, %s134
      %s136 = sphi 0, %s134
      %s137 = sphi 0, %s136
      %s151 = sphi 0, %s137
      %s157 = sphi 0, %s159
      %s160 = sphi 0, %s157
      %s161 = sphi 0, %s160
      %s177 = sphi 0, %s161
    $region4: #{tpu_custom_call.1} parent=1 // loop_header_branch
      %23 = sbr.rel (%p21) target = $region8
    $region5: #{tpu_custom_call.1} parent=1 // loop_body
      %s25 = ssub.s32 %s20, 1
      %s26 = ssub.s32 %s20, 2
      %s33 = sadd.s32 1, %s28
      %p34 = scmp.ge.s32.totalorder %s33, 1
      %s35 = scalar_select %p34, 0, %s33
      %s36 = sadd.s32 1, %s27
      %s37 = scalar_select %p34, %s36, %s27
      %p38 = scmp.ge.s32.totalorder %s37, 2
      %s39 = scalar_select %p38, 0, %s37
      %s40 = ssub.s32 %s27, %s39
      %p41 = scmp.eq.s32.totalorder %s40, 0
      %s43 = sadd.s32 %s42, 1
      %s44 = scalar_select %p41, %s42, %s43
      %p47 = pneg %p41
      %p48 = scmp.eq.s32.totalorder %s20, 1
      %p49 = por %p47, %p48
      %p50 = scmp.ne.s32.totalorder %s42, %s45
      %p51 = scmp.eq.s32.totalorder %s20, 0
      %p52 = por %p50, %p51
      %p53 = scmp.ne.s32.totalorder %s42, %s45
      %p54 = scmp.eq.s32.totalorder %s25, 1
      %p55 = por %p53, %p54
      %p56 = scmp.ne.s32.totalorder %s45, %s46
      %p57 = scmp.eq.s32.totalorder %s25, 0
      %p58 = por %p56, %p57
      %p59 = scmp.ne.s32.totalorder %s45, %s46
      %p60 = scmp.eq.s32.totalorder %s26, 1
      %p61 = por %p59, %p60
      %p63 = scmp.ne.s32.totalorder %s46, %s62
      %p64 = scmp.eq.s32.totalorder %s26, 0
      %p65 = por %p63, %p64
      %s66 = ssub.s32 %s27, %s39
      %p67 = scmp.eq.s32.totalorder %s66, 0
      %s69 = sadd.s32 %s68, 1
      %s70 = scalar_select %p67, %s68, %s69
      %p73 = pneg %p67
      %p74 = scmp.eq.s32.totalorder %s20, 1
      %p75 = por %p73, %p74
      %p76 = scmp.ne.s32.totalorder %s68, %s71
      %p77 = scmp.eq.s32.totalorder %s20, 0
      %p78 = por %p76, %p77
      %p79 = scmp.ne.s32.totalorder %s68, %s71
      %p80 = scmp.eq.s32.totalorder %s25, 1
      %p81 = por %p79, %p80
      %p82 = scmp.ne.s32.totalorder %s71, %s72
      %p83 = scmp.eq.s32.totalorder %s25, 0
      %p84 = por %p82, %p83
      %p85 = scmp.ne.s32.totalorder %s71, %s72
      %p86 = scmp.eq.s32.totalorder %s26, 1
      %p87 = por %p85, %p86
      %p89 = scmp.ne.s32.totalorder %s72, %s88
      %p90 = scmp.eq.s32.totalorder %s26, 0
      %p91 = por %p89, %p90
      %s93 = sadd.s32 %s92, 1
      %p96 = scmp.eq.s32.totalorder %s20, 1
      %p97 = scmp.ne.s32.totalorder %s92, %s94
      %p98 = scmp.eq.s32.totalorder %s20, 0
      %p99 = por %p97, %p98
      %p100 = scmp.ne.s32.totalorder %s92, %s94
      %p101 = scmp.eq.s32.totalorder %s25, 1
      %p102 = por %p100, %p101
      %p103 = scmp.ne.s32.totalorder %s94, %s95
      %p104 = scmp.eq.s32.totalorder %s25, 0
      %p105 = por %p103, %p104
      %p106 = scmp.ne.s32.totalorder %s94, %s95
      %p107 = scmp.eq.s32.totalorder %s26, 1
      %p108 = por %p106, %p107
      %p110 = scmp.ne.s32.totalorder %s95, %s109
      %p111 = scmp.eq.s32.totalorder %s26, 0
      %p112 = por %p110, %p111
      %s114 = sadd.s32 %s113, 1
      %p117 = scmp.eq.s32.totalorder %s20, 1
      %p118 = scmp.ne.s32.totalorder %s113, %s115
      %p119 = scmp.eq.s32.totalorder %s20, 0
      %p120 = por %p118, %p119
      %p121 = scmp.ne.s32.totalorder %s113, %s115
      %p122 = scmp.eq.s32.totalorder %s25, 1
      %p123 = por %p121, %p122
      %p124 = scmp.ne.s32.totalorder %s115, %s116
      %p125 = scmp.eq.s32.totalorder %s25, 0
      %p126 = por %p124, %p125
      %p127 = scmp.ne.s32.totalorder %s115, %s116
      %p128 = scmp.eq.s32.totalorder %s26, 1
      %p129 = por %p127, %p128
      %p131 = scmp.ne.s32.totalorder %s116, %s130
      %p132 = scmp.eq.s32.totalorder %s26, 0
      %p133 = por %p131, %p132
      %s135 = sadd.s32 %s134, 1
      %p138 = scmp.eq.s32.totalorder %s20, 1
      %p139 = scmp.ne.s32.totalorder %s134, %s136
      %p140 = scmp.eq.s32.totalorder %s20, 0
      %p141 = por %p139, %p140
      %p142 = scmp.ne.s32.totalorder %s134, %s136
      %p143 = scmp.eq.s32.totalorder %s25, 1
      %p144 = por %p142, %p143
      %p145 = scmp.ne.s32.totalorder %s136, %s137
      %p146 = scmp.eq.s32.totalorder %s25, 0
      %p147 = por %p145, %p146
      %p148 = scmp.ne.s32.totalorder %s136, %s137
      %p149 = scmp.eq.s32.totalorder %s26, 1
      %p150 = por %p148, %p149
      %p152 = scmp.ne.s32.totalorder %s137, %s151
      %p153 = scmp.eq.s32.totalorder %s26, 0
      %p154 = por %p152, %p153
      %s155 = ssub.s32 %s27, %s39
      %p156 = scmp.eq.s32.totalorder %s155, 0
      %s158 = sadd.s32 %s157, 1
      %s159 = scalar_select %p156, %s157, %s158
      %p162 = pneg %p156
      %p163 = scmp.eq.s32.totalorder %s20, 1
      %p164 = por %p162, %p163
      %p165 = scmp.ne.s32.totalorder %s157, %s160
      %p166 = scmp.eq.s32.totalorder %s20, 0
      %p167 = por %p165, %p166
      %p168 = scmp.ne.s32.totalorder %s157, %s160
      %p169 = scmp.eq.s32.totalorder %s25, 1
      %p170 = por %p168, %p169
      %p171 = scmp.ne.s32.totalorder %s160, %s161
      %p172 = scmp.eq.s32.totalorder %s25, 0
      %p173 = por %p171, %p172
      %p174 = scmp.ne.s32.totalorder %s160, %s161
      %p175 = scmp.eq.s32.totalorder %s26, 1
      %p176 = por %p174, %p175
      %p178 = scmp.ne.s32.totalorder %s161, %s177
      %p179 = scmp.eq.s32.totalorder %s26, 0
      %p180 = por %p178, %p179
      %p181 = scmp.le.s32.totalorder 1, %s20
      %p182 = scmp.lt.s32.totalorder %s20, 3
      %p183 = pnand %p181, %p182
      %p184 = pneg %p183
      // Predicated region
      $region9: #{tpu_custom_call.1} parent=5 // pred_check
        _
      $region10: #{tpu_custom_call.1} parent=5 // pred_check_branch
        %186 = sbr.rel (%p183) target = $region12
      $region11: #{tpu_custom_call.1} parent=5 // pred_region
        %s187 = ssub.s32 %s20, 1
        // Predicated region
        $region13: #{tpu_custom_call.1} parent=11 // pred_check
          %p188 = pneg %p105
        $region14: #{tpu_custom_call.1} parent=11 // pred_check_branch
          %190 = sbr.rel (%p188) target = $region16
        $region15: #{tpu_custom_call.1} parent=11 // pred_region
          _
        $region16: #{tpu_custom_call.1} parent=11 // pred_fallthru
          _
        // Predicated region
        $region17: #{tpu_custom_call.1} parent=11 // pred_check
          %p191 = pneg %p126
        $region18: #{tpu_custom_call.1} parent=11 // pred_check_branch
          %193 = sbr.rel (%p191) target = $region20
        $region19: #{tpu_custom_call.1} parent=11 // pred_region
          _
        $region20: #{tpu_custom_call.1} parent=11 // pred_fallthru
          _
        // Predicated region
        $region21: #{tpu_custom_call.1} parent=11 // pred_check
          %p194 = pneg %p147
        $region22: #{tpu_custom_call.1} parent=11 // pred_check_branch
          %196 = sbr.rel (%p194) target = $region24
        $region23: #{tpu_custom_call.1} parent=11 // pred_region
          %s198 = ssub.s32 8192, 8192
          %199 = vsyncadd [#allocation7], %s198
          %s200 = sshll.u32 [#allocation8], 4
          %s201 = int_to_ptr.vmem [resolvable:$true] %s200
          %206 = dma.hbm_to_vmem [thread:$0]  %s4, 8192, %s201, [#allocation7], 512, 512, 32
        $region24: #{tpu_custom_call.1} parent=11 // pred_fallthru
          _
      $region12: #{tpu_custom_call.1} parent=5 // pred_fallthru
        _
      %p207 = scmp.lt.s32.totalorder %s20, 2
      // Predicated region
      $region25: #{tpu_custom_call.1} parent=5 // pred_check
        %p208 = pneg %p207
      $region26: #{tpu_custom_call.1} parent=5 // pred_check_branch
        %210 = sbr.rel (%p208) target = $region28
      $region27: #{tpu_custom_call.1} parent=5 // pred_region
        // Predicated region
        $region29: #{tpu_custom_call.1} parent=27 // pred_check
          %p211 = pneg %p52
        $region30: #{tpu_custom_call.1} parent=27 // pred_check_branch
          %213 = sbr.rel (%p211) target = $region32
        $region31: #{tpu_custom_call.1} parent=27 // pred_region
          %s214 = sand.u32 %s42, 1
          %s215 = scalar_lea.sflag [#allocation4], %s214
          %s216 = sand.u32 %s42, 1
          %s217 = smul.addr %s216, 40
          %s218 = scalar_lea.vmem [#allocation3], %s217
          %s220 = ssub.s32 640, 640
          %221 = vsyncadd %s215, %s220
          %s222 = smul.addr %s27, 5
          %s223 = smul.addr %s222, 128
          %s224 = scalar_lea.hbm %s0, %s223
          %s225 = sshll.u32 %s218, 4
          %s226 = int_to_ptr.vmem [resolvable:$true] %s225
          %231 = dma.hbm_to_vmem [thread:$0]  %s224, 640, %s226, %s215, 128, 128, 8
        $region32: #{tpu_custom_call.1} parent=27 // pred_fallthru
          _
        // Predicated region
        $region33: #{tpu_custom_call.1} parent=27 // pred_check
          %p232 = pneg %p78
        $region34: #{tpu_custom_call.1} parent=27 // pred_check_branch
          %234 = sbr.rel (%p232) target = $region36
        $region35: #{tpu_custom_call.1} parent=27 // pred_region
          %s235 = sand.u32 %s20, 1
          %s236 = scalar_lea.sflag [#allocation7], %s235
          %s237 = sand.u32 %s68, 1
          %s238 = smul.addr %s237, 40
          %s239 = scalar_lea.vmem [#allocation6], %s238
          %s241 = ssub.s32 640, 640
          %242 = vsyncadd %s236, %s241
          %s243 = smul.addr %s27, 5
          %s244 = smul.addr %s243, 128
          %s245 = scalar_lea.hbm %s1, %s244
          %s246 = sshll.u32 %s239, 4
          %s247 = int_to_ptr.vmem [resolvable:$true] %s246
          %252 = dma.hbm_to_vmem [thread:$0]  %s245, 640, %s247, %s236, 128, 128, 8
        $region36: #{tpu_custom_call.1} parent=27 // pred_fallthru
          _
      $region28: #{tpu_custom_call.1} parent=5 // pred_fallthru
        _
      %p253 = scmp.le.s32.totalorder 1, %s20
      %p254 = scmp.lt.s32.totalorder %s20, 3
      %p255 = pnand %p253, %p254
      %p256 = pneg %p255
      // Predicated region
      $region37: #{tpu_custom_call.1} parent=5 // pred_check
        _
      $region38: #{tpu_custom_call.1} parent=5 // pred_check_branch
        %258 = sbr.rel (%p255) target = $region40
      $region39: #{tpu_custom_call.1} parent=5 // pred_region
        %s259 = ssub.s32 %s20, 1
        %s260 = sand.u32 %s45, 1
        %s261 = scalar_lea.sflag [#allocation4], %s260
        %s262 = sand.u32 %s45, 1
        %s263 = smul.addr %s262, 40
        %s264 = scalar_lea.vmem [#allocation3], %s263
        // Predicated region
        $region41: #{tpu_custom_call.1} parent=39 // pred_check
          %p265 = pneg %p58
        $region42: #{tpu_custom_call.1} parent=39 // pred_check_branch
          %267 = sbr.rel (%p265) target = $region44
        $region43: #{tpu_custom_call.1} parent=39 // pred_region
          %268 = dma.done %s261, 640
        $region44: #{tpu_custom_call.1} parent=39 // pred_fallthru
          _
        %s269 = sand.u32 %s25, 1
        %s270 = scalar_lea.sflag [#allocation7], %s269
        %s271 = sand.u32 %s71, 1
        %s272 = smul.addr %s271, 40
        %s273 = scalar_lea.vmem [#allocation6], %s272
        // Predicated region
        $region45: #{tpu_custom_call.1} parent=39 // pred_check
          %p274 = pneg %p84
        $region46: #{tpu_custom_call.1} parent=39 // pred_check_branch
          %276 = sbr.rel (%p274) target = $region48
        $region47: #{tpu_custom_call.1} parent=39 // pred_region
          %277 = dma.done %s270, 640
        $region48: #{tpu_custom_call.1} parent=39 // pred_fallthru
          _
        // Predicated region
        $region49: #{tpu_custom_call.1} parent=39 // pred_check
          %p278 = pneg %p147
        $region50: #{tpu_custom_call.1} parent=39 // pred_check_branch
          %280 = sbr.rel (%p278) target = $region52
        $region51: #{tpu_custom_call.1} parent=39 // pred_region
          %281 = dma.done [#allocation7], 8192
        $region52: #{tpu_custom_call.1} parent=39 // pred_fallthru
          _
        %s282 = sand.u32 %s45, 1
        %s283 = scalar_lea.sflag [#allocation4], %s282
        %s284 = sand.u32 %s45, 1
        %s285 = smul.addr %s284, 40
        %s286 = scalar_lea.vmem [#allocation3], %s285
        %p287 = pneg %p58
        %p288 = pneg %p55
        %s289 = sand.u32 %s25, 1
        %s290 = scalar_lea.sflag [#allocation7], %s289
        %s291 = sand.u32 %s71, 1
        %s292 = smul.addr %s291, 40
        %s293 = scalar_lea.vmem [#allocation6], %s292
        %p294 = pneg %p84
        %p295 = pneg %p81
        %p296 = pneg %p105
        %p297 = pneg %p102
        %p298 = pneg %p126
        %p299 = pneg %p123
        %p300 = pneg %p147
        %p301 = pneg %p144
        %p302 = pneg %p173
        %p303 = pneg %p170
        %s304 = sand.u32 %s160, 1
        %s305 = scalar_lea.sflag [#allocation5], %s304
        %s306 = sand.u32 %s160, 1
        %s307 = smul.addr %s306, 40
        %s308 = scalar_lea.vmem [#allocation9], %s307
        %p309 = scmp.eq.s32.totalorder %s30, 0
        // Predicated region
        $region53: #{tpu_custom_call.1} parent=39 // pred_check
          %p310 = pneg %p309
        $region54: #{tpu_custom_call.1} parent=39 // pred_check_branch
          %312 = sbr.rel (%p310) target = $region56
        $region55: #{tpu_custom_call.1} parent=39 // pred_region
          %v313 = vld [vmem:[%s264] sm:$0xff]
          %v314 = vld [vmem:[%s264 + $0x8] sm:$0xff]
          %v315 = vld [vmem:[%s264 + $0x10] sm:$0xff]
          %v316 = vld [vmem:[%s264 + $0x18] sm:$0xff]
          %v317 = vld [vmem:[%s264 + $0x20] sm:$0xff]
          %318 = vst [vmem:[#allocation2] sm:$0xff] %v313
          %319 = vst [vmem:[#allocation2 + $0x8] sm:$0xff] %v314
          %320 = vst [vmem:[#allocation2 + $0x10] sm:$0xff] %v315
          %321 = vst [vmem:[#allocation2 + $0x18] sm:$0xff] %v316
          %322 = vst [vmem:[#allocation2 + $0x20] sm:$0xff] %v317
        $region56: #{tpu_custom_call.1} parent=39 // pred_fallthru
          _
        %v323 = vld [vmem:[#allocation2] sm:$0xff]
        %v324 = vld [vmem:[#allocation2 + $0x8] sm:$0xff]
        %v325 = vld [vmem:[#allocation2 + $0x10] sm:$0xff]
        %v326 = vld [vmem:[#allocation2 + $0x18] sm:$0xff]
        %v327 = vld [vmem:[#allocation2 + $0x20] sm:$0xff]
        %v328 = vld [vmem:[#allocation8 + $0x8] sm:$0xff]
        %v329 = vld [vmem:[#allocation8 + $0x10] sm:$0xff]
        %v330 = vld [vmem:[#allocation8 + $0x28] sm:$0xff]
        %v331 = vld [vmem:[#allocation8 + $0x30] sm:$0xff]
        %v332 = vld [vmem:[#allocation8 + $0x48] sm:$0xff]
        %v333 = vld [vmem:[#allocation8 + $0x50] sm:$0xff]
        %v334 = vld [vmem:[#allocation8 + $0x68] sm:$0xff]
        %v335 = vld [vmem:[#allocation8 + $0x70] sm:$0xff]
        %v336 = vld [vmem:[#allocation8 + $0x88] sm:$0xff]
        %v337 = vld [vmem:[#allocation8 + $0x90] sm:$0xff]
        %v338 = vld [vmem:[#allocation8 + $0xa8] sm:$0xff]
        %v339 = vld [vmem:[#allocation8 + $0xb0] sm:$0xff]
        %v340 = vld [vmem:[#allocation8 + $0xc8] sm:$0xff]
        %v341 = vld [vmem:[#allocation8 + $0xd0] sm:$0xff]
        %v342 = vld [vmem:[#allocation8 + $0xe8] sm:$0xff]
        %v343 = vld [vmem:[#allocation8 + $0xf0] sm:$0xff]
        %v344 = vld [vmem:[#allocation8 + $0x108] sm:$0xff]
        %v345 = vld [vmem:[#allocation8 + $0x110] sm:$0xff]
        %v346 = vld [vmem:[#allocation8 + $0x128] sm:$0xff]
        %v347 = vld [vmem:[#allocation8 + $0x130] sm:$0xff]
        %v348 = vld [vmem:[#allocation8 + $0x148] sm:$0xff]
        %v349 = vld [vmem:[#allocation8 + $0x150] sm:$0xff]
        %v350 = vld [vmem:[#allocation8 + $0x168] sm:$0xff]
        %v351 = vld [vmem:[#allocation8 + $0x170] sm:$0xff]
        %v352 = vld [vmem:[#allocation8 + $0x188] sm:$0xff]
        %v353 = vld [vmem:[#allocation8 + $0x190] sm:$0xff]
        %v354 = vld [vmem:[#allocation8 + $0x1a8] sm:$0xff]
        %v355 = vld [vmem:[#allocation8 + $0x1b0] sm:$0xff]
        %v356 = vld [vmem:[#allocation8 + $0x1c8] sm:$0xff]
        %v357 = vld [vmem:[#allocation8 + $0x1d0] sm:$0xff]
        %v358 = vld [vmem:[#allocation8 + $0x1e8] sm:$0xff]
        %v359 = vld [vmem:[#allocation8 + $0x1f0] sm:$0xff]
        %360 = vmatprep.subr.mxu0 %v359
        %361 = vmatpush1.msra.mxu0 %v358
        %362 = vmatprep.subr.mxu0 %v357
        %363 = vmatpush1.msra.mxu0 %v356
        %364 = vmatprep.subr.mxu0 %v355
        %365 = vmatpush1.msra.mxu0 %v354
        %366 = vmatprep.subr.mxu0 %v353
        %367 = vmatpush1.msra.mxu0 %v352
        %368 = vmatprep.subr.mxu0 %v351
        %369 = vmatpush1.msra.mxu0 %v350
        %370 = vmatprep.subr.mxu0 %v349
        %371 = vmatpush1.msra.mxu0 %v348
        %372 = vmatprep.subr.mxu0 %v347
        %373 = vmatpush1.msra.mxu0 %v346
        %374 = vmatprep.subr.mxu0 %v345
        %375 = vmatpush1.msra.mxu0 %v344
        %376 = vmatprep.subr.mxu0 %v343
        %377 = vmatpush1.msra.mxu0 %v342
        %378 = vmatprep.subr.mxu0 %v341
        %379 = vmatpush1.msra.mxu0 %v340
        %380 = vmatprep.subr.mxu0 %v339
        %381 = vmatpush1.msra.mxu0 %v338
        %382 = vmatprep.subr.mxu0 %v337
        %383 = vmatpush1.msra.mxu0 %v336
        %384 = vmatprep.subr.mxu0 %v335
        %385 = vmatpush1.msra.mxu0 %v334
        %386 = vmatprep.subr.mxu0 %v333
        %387 = vmatpush1.msra.mxu0 %v332
        %388 = vmatprep.subr.mxu0 %v331
        %389 = vmatpush1.msra.mxu0 %v330
        %390 = vmatprep.subr.mxu0 %v329
        %391 = vmatpush1.msra.mxu0 %v328
        %392 = vmatprep.subr.mxu0 0.0
        %393 = vmatpush2.msra.mxu0 0.0
        %394 = vmatprep.subr.mxu0 0.0
        %395 = vmatpush2.msra.mxu0 0.0
        %396 = vmatprep.subr.mxu0 0.0
        %397 = vmatpush2.msra.mxu0 0.0
        %398 = vmatprep.subr.mxu0 0.0
        %399 = vmatpush2.msra.mxu0 0.0
        %400 = vmatprep.subr.mxu0 0.0
        %401 = vmatpush2.msra.mxu0 0.0
        %402 = vmatprep.subr.mxu0 0.0
        %403 = vmatpush2.msra.mxu0 0.0
        %404 = vmatprep.subr.mxu0 0.0
        %405 = vmatpush2.msra.mxu0 0.0
        %406 = vmatprep.subr.mxu0 0.0
        %407 = vmatpush2.msra.mxu0 0.0
        %408 = vmatprep.subr.mxu0 0.0
        %409 = vmatpush2.msra.mxu0 0.0
        %410 = vmatprep.subr.mxu0 0.0
        %411 = vmatpush2.msra.mxu0 0.0
        %412 = vmatprep.subr.mxu0 0.0
        %413 = vmatpush2.msra.mxu0 0.0
        %414 = vmatprep.subr.mxu0 0.0
        %415 = vmatpush2.msra.mxu0 0.0
        %416 = vmatprep.subr.mxu0 0.0
        %417 = vmatpush2.msra.mxu0 0.0
        %418 = vmatprep.subr.mxu0 0.0
        %419 = vmatpush2.msra.mxu0 0.0
        %420 = vmatprep.subr.mxu0 0.0
        %421 = vmatpush2.msra.mxu0 0.0
        %422 = vmatprep.subr.mxu0 0.0
        %423 = vmatpush2.msra.mxu0 0.0
        %424 = vmatprep.mubr.f32.mxu0 0.0
        %425 = vmatmul.mubr.f32.gmra.mxu0 %v325
        %v426 = vpop.f32.mrf.mxu0
        %v427 = vadd.f32 0.0, %v426
        %v428 = vpop.f32.mrf.mxu0
        %v429 = vadd.f32 0.0, %v428
        %430 = vmatprep.mubr.f32.mxu0 0.0
        %431 = vmatmul.mubr.f32.gmra.mxu0 %v326
        %v432 = vpop.f32.mrf.mxu0
        %v433 = vadd.f32 0.0, %v432
        %v434 = vpop.f32.mrf.mxu0
        %v435 = vadd.f32 0.0, %v434
        %436 = vmatprep.mubr.f32.mxu0 0.0
        %437 = vmatmul.mubr.f32.gmra.mxu0 %v327
        %v438 = vpop.f32.mrf.mxu0
        %v439 = vadd.f32 0.0, %v438
        %v440 = vpop.f32.mrf.mxu0
        %v441 = vadd.f32 0.0, %v440
        %442 = vdwg.mxu0
        %v443 = vld [vmem:[#allocation8] sm:$0xff]
        %v444 = vld [vmem:[#allocation8 + $0x20] sm:$0xff]
        %v445 = vld [vmem:[#allocation8 + $0x40] sm:$0xff]
        %v446 = vld [vmem:[#allocation8 + $0x60] sm:$0xff]
        %v447 = vld [vmem:[#allocation8 + $0x80] sm:$0xff]
        %v448 = vld [vmem:[#allocation8 + $0xa0] sm:$0xff]
        %v449 = vld [vmem:[#allocation8 + $0xc0] sm:$0xff]
        %v450 = vld [vmem:[#allocation8 + $0xe0] sm:$0xff]
        %v451 = vld [vmem:[#allocation8 + $0x100] sm:$0xff]
        %v452 = vld [vmem:[#allocation8 + $0x120] sm:$0xff]
        %v453 = vld [vmem:[#allocation8 + $0x140] sm:$0xff]
        %v454 = vld [vmem:[#allocation8 + $0x160] sm:$0xff]
        %v455 = vld [vmem:[#allocation8 + $0x180] sm:$0xff]
        %v456 = vld [vmem:[#allocation8 + $0x1a0] sm:$0xff]
        %v457 = vld [vmem:[#allocation8 + $0x1c0] sm:$0xff]
        %v458 = vld [vmem:[#allocation8 + $0x1e0] sm:$0xff]
        %v459 = vld [vmem:[%s3] sm:$0xff]
        %v460 = vld [vmem:[%s3 + $0x8] sm:$0xff]
        %vm461 = vcmask 195584
        %v463 = vsel %vm461, %v459, 0
        %v466 = vsel %vm461, %v460, 0
        %468 = vmatprep.subr.mxu0 0.0
        %469 = vmatpush1.msra.mxu0 0.0
        %470 = vmatprep.subr.mxu0 0.0
        %471 = vmatpush1.msra.mxu0 0.0
        %472 = vmatprep.subr.mxu0 0.0
        %473 = vmatpush1.msra.mxu0 0.0
        %474 = vmatprep.subr.mxu0 0.0
        %475 = vmatpush1.msra.mxu0 0.0
        %476 = vmatprep.subr.mxu0 0.0
        %477 = vmatpush1.msra.mxu0 0.0
        %478 = vmatprep.subr.mxu0 0.0
        %479 = vmatpush1.msra.mxu0 0.0
        %480 = vmatprep.subr.mxu0 0.0
        %481 = vmatpush1.msra.mxu0 0.0
        %482 = vmatprep.subr.mxu0 0.0
        %483 = vmatpush1.msra.mxu0 0.0
        %484 = vmatprep.subr.mxu0 0.0
        %485 = vmatpush1.msra.mxu0 0.0
        %486 = vmatprep.subr.mxu0 0.0
        %487 = vmatpush1.msra.mxu0 0.0
        %488 = vmatprep.subr.mxu0 0.0
        %489 = vmatpush1.msra.mxu0 0.0
        %490 = vmatprep.subr.mxu0 0.0
        %491 = vmatpush1.msra.mxu0 0.0
        %492 = vmatprep.subr.mxu0 0.0
        %493 = vmatpush1.msra.mxu0 0.0
        %494 = vmatprep.subr.mxu0 0.0
        %495 = vmatpush1.msra.mxu0 %v439
        %496 = vmatprep.subr.mxu0 0.0
        %497 = vmatpush1.msra.mxu0 %v433
        %498 = vmatprep.subr.mxu0 0.0
        %499 = vmatpush1.msra.mxu0 %v427
        %500 = vmatprep.subr.mxu0 0.0
        %501 = vmatpush2.msra.mxu0 0.0
        %502 = vmatprep.subr.mxu0 0.0
        %503 = vmatpush2.msra.mxu0 0.0
        %504 = vmatprep.subr.mxu0 0.0
        %505 = vmatpush2.msra.mxu0 0.0
        %506 = vmatprep.subr.mxu0 0.0
        %507 = vmatpush2.msra.mxu0 0.0
        %508 = vmatprep.subr.mxu0 0.0
        %509 = vmatpush2.msra.mxu0 0.0
        %510 = vmatprep.subr.mxu0 0.0
        %511 = vmatpush2.msra.mxu0 0.0
        %512 = vmatprep.subr.mxu0 0.0
        %513 = vmatpush2.msra.mxu0 0.0
        %514 = vmatprep.subr.mxu0 0.0
        %515 = vmatpush2.msra.mxu0 0.0
        %516 = vmatprep.subr.mxu0 0.0
        %517 = vmatpush2.msra.mxu0 0.0
        %518 = vmatprep.subr.mxu0 0.0
        %519 = vmatpush2.msra.mxu0 0.0
        %520 = vmatprep.subr.mxu0 0.0
        %521 = vmatpush2.msra.mxu0 0.0
        %522 = vmatprep.subr.mxu0 0.0
        %523 = vmatpush2.msra.mxu0 0.0
        %524 = vmatprep.subr.mxu0 0.0
        %525 = vmatpush2.msra.mxu0 0.0
        %526 = vmatprep.subr.mxu0 0.0
        %527 = vmatpush2.msra.mxu0 0.0
        %528 = vmatprep.subr.mxu0 0.0
        %529 = vmatpush2.msra.mxu0 0.0
        %530 = vmatprep.subr.mxu0 0.0
        %531 = vmatpush2.msra.mxu0 0.0
        %532 = vmatprep.mubr.f32.mxu0 0.0
        %533 = vmatmul.mubr.f32.gmra.mxu0 %v463
        %v534 = vpop.f32.mrf.mxu0
        %v535 = vadd.f32 0.0, %v534
        %v536 = vpop.f32.mrf.mxu0
        %537 = vmatprep.mubr.f32.mxu0 0.0
        %538 = vmatmul.mubr.f32.gmra.mxu0 %v466
        %v539 = vpop.f32.mrf.mxu0
        %v540 = vadd.f32 0.0, %v539
        %v541 = vpop.f32.mrf.mxu0
        %542 = vdwg.mxu0
        %543 = vmatprep.subr.mxu0 0.0
        %544 = vmatpush1.msra.mxu0 %v458
        %545 = vmatprep.subr.mxu0 0.0
        %546 = vmatpush1.msra.mxu0 %v457
        %547 = vmatprep.subr.mxu0 0.0
        %548 = vmatpush1.msra.mxu0 %v456
        %549 = vmatprep.subr.mxu0 0.0
        %550 = vmatpush1.msra.mxu0 %v455
        %551 = vmatprep.subr.mxu0 0.0
        %552 = vmatpush1.msra.mxu0 %v454
        %553 = vmatprep.subr.mxu0 0.0
        %554 = vmatpush1.msra.mxu0 %v453
        %555 = vmatprep.subr.mxu0 0.0
        %556 = vmatpush1.msra.mxu0 %v452
        %557 = vmatprep.subr.mxu0 0.0
        %558 = vmatpush1.msra.mxu0 %v451
        %559 = vmatprep.subr.mxu0 0.0
        %560 = vmatpush1.msra.mxu0 %v450
        %561 = vmatprep.subr.mxu0 0.0
        %562 = vmatpush1.msra.mxu0 %v449
        %563 = vmatprep.subr.mxu0 0.0
        %564 = vmatpush1.msra.mxu0 %v448
        %565 = vmatprep.subr.mxu0 0.0
        %566 = vmatpush1.msra.mxu0 %v447
        %567 = vmatprep.subr.mxu0 0.0
        %568 = vmatpush1.msra.mxu0 %v446
        %569 = vmatprep.subr.mxu0 0.0
        %570 = vmatpush1.msra.mxu0 %v445
        %571 = vmatprep.subr.mxu0 0.0
        %572 = vmatpush1.msra.mxu0 %v444
        %573 = vmatprep.subr.mxu0 0.0
        %574 = vmatpush1.msra.mxu0 %v443
        %575 = vmatprep.subr.mxu0 0.0
        %576 = vmatpush2.msra.mxu0 0.0
        %577 = vmatprep.subr.mxu0 0.0
        %578 = vmatpush2.msra.mxu0 0.0
        %579 = vmatprep.subr.mxu0 0.0
        %580 = vmatpush2.msra.mxu0 0.0
        %581 = vmatprep.subr.mxu0 0.0
        %582 = vmatpush2.msra.mxu0 0.0
        %583 = vmatprep.subr.mxu0 0.0
        %584 = vmatpush2.msra.mxu0 0.0
        %585 = vmatprep.subr.mxu0 0.0
        %586 = vmatpush2.msra.mxu0 0.0
        %587 = vmatprep.subr.mxu0 0.0
        %588 = vmatpush2.msra.mxu0 0.0
        %589 = vmatprep.subr.mxu0 0.0
        %590 = vmatpush2.msra.mxu0 0.0
        %591 = vmatprep.subr.mxu0 0.0
        %592 = vmatpush2.msra.mxu0 0.0
        %593 = vmatprep.subr.mxu0 0.0
        %594 = vmatpush2.msra.mxu0 0.0
        %595 = vmatprep.subr.mxu0 0.0
        %596 = vmatpush2.msra.mxu0 0.0
        %597 = vmatprep.subr.mxu0 0.0
        %598 = vmatpush2.msra.mxu0 0.0
        %599 = vmatprep.subr.mxu0 0.0
        %600 = vmatpush2.msra.mxu0 0.0
        %601 = vmatprep.subr.mxu0 0.0
        %602 = vmatpush2.msra.mxu0 0.0
        %603 = vmatprep.subr.mxu0 0.0
        %604 = vmatpush2.msra.mxu0 0.0
        %605 = vmatprep.subr.mxu0 0.0
        %606 = vmatpush2.msra.mxu0 0.0
        %607 = vmatprep.mubr.f32.mxu0 0.0
        %608 = vmatmul.mubr.f32.gmra.mxu0 %v323
        %v609 = vpop.f32.mrf.mxu0
        %v610 = vadd.f32 %v535, %v609
        %v611 = vpop.f32.mrf.mxu0
        %612 = vmatprep.mubr.f32.mxu0 0.0
        %613 = vmatmul.mubr.f32.gmra.mxu0 %v324
        %v614 = vpop.f32.mrf.mxu0
        %v615 = vadd.f32 %v540, %v614
        %v616 = vpop.f32.mrf.mxu0
        %617 = vdwg.mxu0
        %v618 = vld [vmem:[%s273] sm:$0xff]
        %v619 = vld [vmem:[%s273 + $0x8] sm:$0xff]
        %v620 = vadd.f32 %v610, %v618
        %v621 = vadd.f32 %v615, %v619
        %v622 = vmax.f32 %v620, 0.0
        %v623 = vmax.f32 %v621, 0.0
        %v624 = vld [vmem:[#allocation8 + $0x18] sm:$0xff]
        %v625 = vld [vmem:[#allocation8 + $0x38] sm:$0xff]
        %v626 = vld [vmem:[#allocation8 + $0x58] sm:$0xff]
        %v627 = vld [vmem:[#allocation8 + $0x78] sm:$0xff]
        %v628 = vld [vmem:[#allocation8 + $0x98] sm:$0xff]
        %v629 = vld [vmem:[#allocation8 + $0xb8] sm:$0xff]
        %v630 = vld [vmem:[#allocation8 + $0xd8] sm:$0xff]
        %v631 = vld [vmem:[#allocation8 + $0xf8] sm:$0xff]
        %v632 = vld [vmem:[#allocation8 + $0x118] sm:$0xff]
        %v633 = vld [vmem:[#allocation8 + $0x138] sm:$0xff]
        %v634 = vld [vmem:[#allocation8 + $0x158] sm:$0xff]
        %v635 = vld [vmem:[#allocation8 + $0x178] sm:$0xff]
        %v636 = vld [vmem:[#allocation8 + $0x198] sm:$0xff]
        %v637 = vld [vmem:[#allocation8 + $0x1b8] sm:$0xff]
        %v638 = vld [vmem:[#allocation8 + $0x1d8] sm:$0xff]
        %v639 = vld [vmem:[#allocation8 + $0x1f8] sm:$0xff]
        %640 = vmatprep.subr.mxu0 0.0
        %641 = vmatpush1.msra.mxu0 %v639
        %642 = vmatprep.subr.mxu0 0.0
        %643 = vmatpush1.msra.mxu0 %v638
        %644 = vmatprep.subr.mxu0 0.0
        %645 = vmatpush1.msra.mxu0 %v637
        %646 = vmatprep.subr.mxu0 0.0
        %647 = vmatpush1.msra.mxu0 %v636
        %648 = vmatprep.subr.mxu0 0.0
        %649 = vmatpush1.msra.mxu0 %v635
        %650 = vmatprep.subr.mxu0 0.0
        %651 = vmatpush1.msra.mxu0 %v634
        %652 = vmatprep.subr.mxu0 0.0
        %653 = vmatpush1.msra.mxu0 %v633
        %654 = vmatprep.subr.mxu0 0.0
        %655 = vmatpush1.msra.mxu0 %v632
        %656 = vmatprep.subr.mxu0 0.0
        %657 = vmatpush1.msra.mxu0 %v631
        %658 = vmatprep.subr.mxu0 0.0
        %659 = vmatpush1.msra.mxu0 %v630
        %660 = vmatprep.subr.mxu0 0.0
        %661 = vmatpush1.msra.mxu0 %v629
        %662 = vmatprep.subr.mxu0 0.0
        %663 = vmatpush1.msra.mxu0 %v628
        %664 = vmatprep.subr.mxu0 0.0
        %665 = vmatpush1.msra.mxu0 %v627
        %666 = vmatprep.subr.mxu0 0.0
        %667 = vmatpush1.msra.mxu0 %v626
        %668 = vmatprep.subr.mxu0 0.0
        %669 = vmatpush1.msra.mxu0 %v625
        %670 = vmatprep.subr.mxu0 0.0
        %671 = vmatpush1.msra.mxu0 %v624
        %672 = vmatprep.subr.mxu0 0.0
        %673 = vmatpush2.msra.mxu0 0.0
        %674 = vmatprep.subr.mxu0 0.0
        %675 = vmatpush2.msra.mxu0 0.0
        %676 = vmatprep.subr.mxu0 0.0
        %677 = vmatpush2.msra.mxu0 0.0
        %678 = vmatprep.subr.mxu0 0.0
        %679 = vmatpush2.msra.mxu0 0.0
        %680 = vmatprep.subr.mxu0 0.0
        %681 = vmatpush2.msra.mxu0 0.0
        %682 = vmatprep.subr.mxu0 0.0
        %683 = vmatpush2.msra.mxu0 0.0
        %684 = vmatprep.subr.mxu0 0.0
        %685 = vmatpush2.msra.mxu0 0.0
        %686 = vmatprep.subr.mxu0 0.0
        %687 = vmatpush2.msra.mxu0 0.0
        %688 = vmatprep.subr.mxu0 0.0
        %689 = vmatpush2.msra.mxu0 0.0
        %690 = vmatprep.subr.mxu0 0.0
        %691 = vmatpush2.msra.mxu0 0.0
        %692 = vmatprep.subr.mxu0 0.0
        %693 = vmatpush2.msra.mxu0 0.0
        %694 = vmatprep.subr.mxu0 0.0
        %695 = vmatpush2.msra.mxu0 0.0
        %696 = vmatprep.subr.mxu0 0.0
        %697 = vmatpush2.msra.mxu0 0.0
        %698 = vmatprep.subr.mxu0 0.0
        %699 = vmatpush2.msra.mxu0 0.0
        %700 = vmatprep.subr.mxu0 0.0
        %701 = vmatpush2.msra.mxu0 0.0
        %702 = vmatprep.subr.mxu0 0.0
        %703 = vmatpush2.msra.mxu0 0.0
        %704 = vmatprep.mubr.f32.mxu0 0.0
        %705 = vmatmul.mubr.f32.gmra.mxu0 %v622
        %v706 = vpop.f32.mrf.mxu0
        %v707 = vadd.f32 0.0, %v706
        %v708 = vpop.f32.mrf.mxu0
        %709 = vmatprep.mubr.f32.mxu0 0.0
        %710 = vmatmul.mubr.f32.gmra.mxu0 %v623
        %v711 = vpop.f32.mrf.mxu0
        %v712 = vadd.f32 0.0, %v711
        %v713 = vpop.f32.mrf.mxu0
        %714 = vdwg.mxu0
        %v715 = vld [vmem:[%s2] sm:$0xff]
        %v716 = vld [vmem:[%s2 + $0x8] sm:$0xff]
        %v717 = vld [vmem:[%s2 + $0x10] sm:$0xff]
        %vm718 = vcmask 130048
        %v720 = vsel %vm718, %v715, 0
        %v723 = vsel %vm718, %v716, 0
        %v726 = vsel %vm718, %v717, 0
        %728 = vmatprep.subr.mxu0 0.0
        %729 = vmatpush1.msra.mxu0 0.0
        %730 = vmatprep.subr.mxu0 0.0
        %731 = vmatpush1.msra.mxu0 0.0
        %732 = vmatprep.subr.mxu0 0.0
        %733 = vmatpush1.msra.mxu0 0.0
        %734 = vmatprep.subr.mxu0 0.0
        %735 = vmatpush1.msra.mxu0 0.0
        %736 = vmatprep.subr.mxu0 0.0
        %737 = vmatpush1.msra.mxu0 0.0
        %738 = vmatprep.subr.mxu0 0.0
        %739 = vmatpush1.msra.mxu0 0.0
        %740 = vmatprep.subr.mxu0 0.0
        %741 = vmatpush1.msra.mxu0 0.0
        %742 = vmatprep.subr.mxu0 0.0
        %743 = vmatpush1.msra.mxu0 0.0
        %744 = vmatprep.subr.mxu0 0.0
        %745 = vmatpush1.msra.mxu0 0.0
        %746 = vmatprep.subr.mxu0 0.0
        %747 = vmatpush1.msra.mxu0 0.0
        %748 = vmatprep.subr.mxu0 0.0
        %749 = vmatpush1.msra.mxu0 0.0
        %750 = vmatprep.subr.mxu0 0.0
        %751 = vmatpush1.msra.mxu0 0.0
        %752 = vmatprep.subr.mxu0 0.0
        %753 = vmatpush1.msra.mxu0 0.0
        %754 = vmatprep.subr.mxu0 0.0
        %755 = vmatpush1.msra.mxu0 0.0
        %756 = vmatprep.subr.mxu0 0.0
        %757 = vmatpush1.msra.mxu0 %v712
        %758 = vmatprep.subr.mxu0 0.0
        %759 = vmatpush1.msra.mxu0 %v707
        %760 = vmatprep.subr.mxu0 0.0
        %761 = vmatpush2.msra.mxu0 0.0
        %762 = vmatprep.subr.mxu0 0.0
        %763 = vmatpush2.msra.mxu0 0.0
        %764 = vmatprep.subr.mxu0 0.0
        %765 = vmatpush2.msra.mxu0 0.0
        %766 = vmatprep.subr.mxu0 0.0
        %767 = vmatpush2.msra.mxu0 0.0
        %768 = vmatprep.subr.mxu0 0.0
        %769 = vmatpush2.msra.mxu0 0.0
        %770 = vmatprep.subr.mxu0 0.0
        %771 = vmatpush2.msra.mxu0 0.0
        %772 = vmatprep.subr.mxu0 0.0
        %773 = vmatpush2.msra.mxu0 0.0
        %774 = vmatprep.subr.mxu0 0.0
        %775 = vmatpush2.msra.mxu0 0.0
        %776 = vmatprep.subr.mxu0 0.0
        %777 = vmatpush2.msra.mxu0 0.0
        %778 = vmatprep.subr.mxu0 0.0
        %779 = vmatpush2.msra.mxu0 0.0
        %780 = vmatprep.subr.mxu0 0.0
        %781 = vmatpush2.msra.mxu0 0.0
        %782 = vmatprep.subr.mxu0 0.0
        %783 = vmatpush2.msra.mxu0 0.0
        %784 = vmatprep.subr.mxu0 0.0
        %785 = vmatpush2.msra.mxu0 0.0
        %786 = vmatprep.subr.mxu0 0.0
        %787 = vmatpush2.msra.mxu0 0.0
        %788 = vmatprep.subr.mxu0 0.0
        %789 = vmatpush2.msra.mxu0 0.0
        %790 = vmatprep.subr.mxu0 0.0
        %791 = vmatpush2.msra.mxu0 0.0
        %792 = vmatprep.mubr.f32.mxu0 0.0
        %793 = vmatmul.mubr.f32.gmra.mxu0 %v720
        %v794 = vpop.f32.mrf.mxu0
        %v795 = vadd.f32 0.0, %v794
        %v796 = vpop.f32.mrf.mxu0
        %797 = vmatprep.mubr.f32.mxu0 0.0
        %798 = vmatmul.mubr.f32.gmra.mxu0 %v723
        %v799 = vpop.f32.mrf.mxu0
        %v800 = vadd.f32 0.0, %v799
        %v801 = vpop.f32.mrf.mxu0
        %802 = vmatprep.mubr.f32.mxu0 0.0
        %803 = vmatmul.mubr.f32.gmra.mxu0 %v726
        %v804 = vpop.f32.mrf.mxu0
        %v805 = vadd.f32 0.0, %v804
        %v806 = vpop.f32.mrf.mxu0
        %807 = vdwg.mxu0
        %v808 = vsub.f32 %v429, %v795
        %v809 = vsub.f32 %v435, %v800
        %v810 = vsub.f32 %v441, %v805
        %v811 = vld [vmem:[%s273 + $0x10] sm:$0xff]
        %v812 = vld [vmem:[%s273 + $0x18] sm:$0xff]
        %v813 = vld [vmem:[%s273 + $0x20] sm:$0xff]
        %v814 = vadd.f32 %v808, %v811
        %v815 = vadd.f32 %v809, %v812
        %v816 = vadd.f32 %v810, %v813
        %v817 = vmax.f32 %v814, 0.0
        %v818 = vmax.f32 %v815, 0.0
        %v819 = vmax.f32 %v816, 0.0
        %820 = vst [vmem:[#allocation2] sm:$0xff] %v622
        %821 = vst [vmem:[#allocation2 + $0x8] sm:$0xff] %v623
        %822 = vst [vmem:[#allocation2 + $0x10] sm:$0xff] %v817
        %823 = vst [vmem:[#allocation2 + $0x18] sm:$0xff] %v818
        %824 = vst [vmem:[#allocation2 + $0x20] sm:$0xff] %v819
        // Predicated region
        $region57: #{tpu_custom_call.1} parent=39 // pred_check
          %p825 = pneg %p309
        $region58: #{tpu_custom_call.1} parent=39 // pred_check_branch
          %827 = sbr.rel (%p825) target = $region60
        $region59: #{tpu_custom_call.1} parent=39 // pred_region
          %v828 = vld [vmem:[#allocation2] sm:$0xff]
          %v829 = vld [vmem:[#allocation2 + $0x8] sm:$0xff]
          %v830 = vld [vmem:[#allocation2 + $0x10] sm:$0xff]
          %v831 = vld [vmem:[#allocation2 + $0x18] sm:$0xff]
          %v832 = vld [vmem:[#allocation2 + $0x20] sm:$0xff]
          %833 = vst [vmem:[%s308] sm:$0xff] %v828
          %834 = vst [vmem:[%s308 + $0x8] sm:$0xff] %v829
          %835 = vst [vmem:[%s308 + $0x10] sm:$0xff] %v830
          %836 = vst [vmem:[%s308 + $0x18] sm:$0xff] %v831
          %837 = vst [vmem:[%s308 + $0x20] sm:$0xff] %v832
        $region60: #{tpu_custom_call.1} parent=39 // pred_fallthru
          _
        %s838 = sand.u32 %s160, 1
        %s839 = scalar_lea.sflag [#allocation5], %s838
        %s840 = sand.u32 %s160, 1
        %s841 = smul.addr %s840, 40
        %s842 = scalar_lea.vmem [#allocation9], %s841
        // Predicated region
        $region61: #{tpu_custom_call.1} parent=39 // pred_check
          %p843 = pneg %p170
        $region62: #{tpu_custom_call.1} parent=39 // pred_check_branch
          %845 = sbr.rel (%p843) target = $region64
        $region63: #{tpu_custom_call.1} parent=39 // pred_region
          %s847 = ssub.s32 640, 640
          %848 = vsyncadd %s839, %s847
          %s849 = smul.addr %s29, 5
          %s850 = smul.addr %s849, 128
          %s851 = scalar_lea.hbm %s5, %s850
          %s852 = sshll.u32 %s842, 4
          %s853 = int_to_ptr.vmem [resolvable:$true] %s852
          %858 = dma.vmem_to_hbm [thread:$0]  %s853, 640, %s851, %s839, 128, 128, 8
        $region64: #{tpu_custom_call.1} parent=39 // pred_fallthru
          _
      $region40: #{tpu_custom_call.1} parent=5 // pred_fallthru
        _
      %p859 = scmp.le.s32.totalorder 2, %s20
      // Predicated region
      $region65: #{tpu_custom_call.1} parent=5 // pred_check
        %p860 = pneg %p859
      $region66: #{tpu_custom_call.1} parent=5 // pred_check_branch
        %862 = sbr.rel (%p860) target = $region68
      $region67: #{tpu_custom_call.1} parent=5 // pred_region
        %s863 = ssub.s32 %s20, 2
        // Predicated region
        $region69: #{tpu_custom_call.1} parent=67 // pred_check
          %p864 = pneg %p176
        $region70: #{tpu_custom_call.1} parent=67 // pred_check_branch
          %866 = sbr.rel (%p864) target = $region72
        $region71: #{tpu_custom_call.1} parent=67 // pred_region
          %s867 = sand.u32 %s161, 1
          %s868 = scalar_lea.sflag [#allocation5], %s867
          %s869 = sand.u32 %s161, 1
          %s870 = smul.addr %s869, 40
          %s871 = scalar_lea.vmem [#allocation9], %s870
          %872 = dma.done %s868, 640
        $region72: #{tpu_custom_call.1} parent=67 // pred_fallthru
          _
      $region68: #{tpu_custom_call.1} parent=5 // pred_fallthru
        _
    $region6: #{tpu_custom_call.1} parent=1 // loop_footer
      %s24 = sadd.s32 1, %s20
    $region7: #{tpu_custom_call.1} parent=1 // loop_footer_branch
      %19 = sbr.rel target = $region3
    $region8: #{tpu_custom_call.1} parent=1 // loop_exit
      _
    %873 = vsyncpa [#allocation4], 1
    %s874 = scalar_lea.sflag [#allocation4], 1
    %875 = vsyncpa %s874, 1
    %876 = vsyncpa [#allocation7], 1
    %s877 = scalar_lea.sflag [#allocation7], 1
    %878 = vsyncpa %s877, 1
    %879 = vsyncpa [#allocation5], 1
    %s880 = scalar_lea.sflag [#allocation5], 1
    %881 = vsyncpa %s880, 1

</llo_original>
